<compile_context>
chip_gen: v5e
topology: v5e:2x2
jax: 0.10.0
libtpu: 0.0.40
codegen_flags: <defaults>
</compile_context>

<pallas_src>
import functools
import math

import jax
import jax.numpy as jnp
from jax.experimental import pallas as pl
from jax.experimental.pallas import tpu as pltpu

LOG_MU_MIN = math.log(1e-5)
LOG_MU_MAX = math.log(1e6)
LOG_TH_MIN = math.log(1e-4)
LOG_TH_MAX = math.log(1e4)
SIG_CLIP = 30.0   # |logit| clamp for the exp-based sigmoid (fully saturated beyond this in f32)


def _round_up(n, m):
    return ((n + m - 1) // m) * m


def zinb_forward_kernel(
    x_ref,                                          # (TB, D+1): [x | sf]
    we0_ref, be0_ref, we1_ref, be1_ref,             # encoder linears (we0 has a zero sf row)
    wbt_ref, bb_ref,                                 # bottleneck linear, W stored as (1, H1)
    wd0_ref, bd0_ref, wd1_ref, bd1_ref,              # decoder hidden linears
    wout_ref, bout_ref,                              # final linear -> (H0, P), lane padded
    fused_ref,                                       # (TB, P): [pi | mu | theta | scores | pad]
    *, input_size,
):
    f32 = jnp.float32
    D = input_size
    xa = x_ref[...].astype(f32)                      # (TB, D+1); compute stays f32
    sf = xa[:, D:D + 1]                              # (TB, 1) size factors

    # ---- encoder: Linear -> ReLU (x2).  Row D of we0 is zero, so the sf column is ignored ----
    h = jnp.dot(xa, we0_ref[...], preferred_element_type=f32) + be0_ref[...]
    h = jnp.maximum(h, 0.0)
    h = jnp.dot(h, we1_ref[...], preferred_element_type=f32) + be1_ref[...]
    h = jnp.maximum(h, 0.0)                          # (TB, H1)

    # ---- bottleneck: Linear(H1 -> 1).  middle_size == 1 -> XLU lane reduction, not an N=1 matmul ----
    scores = jnp.sum(h * wbt_ref[...], axis=-1, keepdims=True) + bb_ref[...]   # (TB, 1) pre-tanh
    z = jnp.tanh(scores)

    # ---- decoder ----
    d = jnp.maximum(z * wd0_ref[...] + bd0_ref[...], 0.0)       # Linear(1 -> H1) == outer product
    d = jnp.dot(d, wd1_ref[...], preferred_element_type=f32) + bd1_ref[...]
    d = jnp.maximum(d, 0.0)                                     # (TB, H0)
    dec = jnp.dot(d, wout_ref[...], preferred_element_type=f32) + bout_ref[...]   # (TB, P)

    # ---- single-transcendental per-band nonlinearity on the lane-dense slab ----
    # lanes [0,D)   : pi    = sigmoid(dec) = 1 / (1 + exp(-dec))
    # lanes [D,2D)  : mu    = exp(clip(dec, log 1e-5, log 1e6)) * sf
    # lanes [2D,3D) : theta = exp(clip(dec, log 1e-4, log 1e4))
    # lane 3D       : pre-tanh encoded_scores; remaining pad lanes hold exp(0)=1 (sliced off)
    P = dec.shape[-1]
    lane = jax.lax.broadcasted_iota(jnp.int32, (1, P), 1)       # (1, P) only — no full-tile iota
    is_pi = lane < D
    is_mu = (lane >= D) & (lane < 2 * D)
    is_score = lane == 3 * D
    lo = jnp.where(is_pi, -SIG_CLIP, jnp.where(is_mu, LOG_MU_MIN, LOG_TH_MIN))   # (1, P)
    hi = jnp.where(is_pi, SIG_CLIP, jnp.where(is_mu, LOG_MU_MAX, LOG_TH_MAX))    # (1, P)
    arg = jnp.clip(jnp.where(is_pi, -dec, dec), lo, hi)
    e = jnp.exp(arg)                                            # one EUP pass over the whole slab
    sig = pl.reciprocal(1.0 + e, approx=True)                   # near-free EUP slot
    val = jnp.where(is_pi, sig, jnp.where(is_mu, e * sf, e))
    fused_ref[...] = jnp.where(is_score, scores, val).astype(fused_ref.dtype)


def xavier_uniform(key, fan_in, fan_out):
    limit = math.sqrt(6.0 / (fan_in + fan_out))
    return jax.random.uniform(key, (fan_in, fan_out), jnp.float32, -limit, limit)


def make_params(key, input_size, hidden_sizes, middle_size=1):
    """Xavier-uniform weights, zero biases (matches init_weights).

    we0 gets an extra zero row (the folded sf column); the final linear is lane-padded
    to a multiple of 128 with one spare lane reserved for the fused encoded_scores.
    """
    h0, h1 = hidden_sizes
    keys = jax.random.split(key, 6)
    out_dim = 3 * input_size
    out_pad = _round_up(out_dim + 1, 128)            # +1 spare lane for encoded_scores
    wout = jnp.pad(xavier_uniform(keys[5], h0, out_dim), ((0, 0), (0, out_pad - out_dim)))
    we0 = jnp.pad(xavier_uniform(keys[0], input_size, h0), ((0, 1), (0, 0)))   # zero row for sf col
    return dict(
        we0=we0,
        be0=jnp.zeros((1, h0), jnp.float32),
        we1=xavier_uniform(keys[1], h0, h1),
        be1=jnp.zeros((1, h1), jnp.float32),
        # bottleneck weight is (h1, middle_size) in PyTorch terms; stored transposed as (1, h1)
        wbt=xavier_uniform(keys[2], h1, middle_size).T,
        bb=jnp.zeros((1, middle_size), jnp.float32),
        wd0=xavier_uniform(keys[3], middle_size, h1),
        bd0=jnp.zeros((1, h1), jnp.float32),
        wd1=xavier_uniform(keys[4], h1, h0),
        bd1=jnp.zeros((1, h0), jnp.float32),
        wout=wout,
        bout=jnp.zeros((1, out_pad), jnp.float32),
    )


def zinb_autoencoder_forward(x, sf, batch_matrix, params, *,
                             block_rows=8192, io_dtype=jnp.bfloat16,
                             vmem_limit_bytes=48 * 1024 * 1024):
    """Mirrors ZINBAutoencoder.forward; returns [pi, mu, theta, encoded_scores, batch_matrix].

    block_rows: batch-tile size. 8192 suits v7x-class bandwidth; 2048-4096 is plenty on v5e.
    io_dtype: dtype of the streamed x/sf slab and fused output (bf16 halves HBM bytes on this
    bandwidth-bound kernel); in-kernel compute and weights stay f32.  encoded_scores inherit
    io_dtype — pass io_dtype=jnp.float32 if exact pre-tanh scores are needed downstream.
    vmem_limit_bytes: explicit scoped-VMEM budget (lane-padded pipeline buffers + full-width
    f32 temporaries dominate; the default 16 MiB on v5e is too small at large tiles).
    """
    B, D = x.shape
    P = params["wout"].shape[1]                      # lane-padded output width (multiple of 128)

    # Batch tiling: tile rounded to a sublane multiple, B padded to a full tile so every
    # block is dense (padded rows are zeros and sliced off).
    tb = min(_round_up(B, 8), block_rows)
    B_pad = _round_up(B, tb)

    # Fold sf into the last column of x -> a single streamed input (no (TB,1) lane-padded block).
    x_in = jnp.concatenate([x, sf.reshape(B, 1)], axis=1).astype(io_dtype)
    if B_pad != B:
        x_in = jnp.pad(x_in, ((0, B_pad - B), (0, 0)))

    weights = (
        params["we0"], params["be0"], params["we1"], params["be1"],
        params["wbt"], params["bb"],
        params["wd0"], params["bd0"], params["wd1"], params["bd1"],
        params["wout"], params["bout"],
    )

    def resident_spec(arr):
        # Constant block index -> fetched once, stays resident in VMEM across grid steps.
        return pl.BlockSpec(arr.shape, lambda i: (0, 0))

    fused = pl.pallas_call(
        functools.partial(zinb_forward_kernel, input_size=D),
        out_shape=jax.ShapeDtypeStruct((B_pad, P), io_dtype),
        grid=(B_pad // tb,),
        in_specs=[pl.BlockSpec((tb, D + 1), lambda i: (i, 0))]
                 + [resident_spec(w) for w in weights],
        out_specs=pl.BlockSpec((tb, P), lambda i: (i, 0)),
        compiler_params=pltpu.CompilerParams(
            dimension_semantics=("parallel",),       # shards batch tiles over v7x's 2 TCs
            vmem_limit_bytes=vmem_limit_bytes,
        ),
    )(x_in, *weights)

    fused = fused[:B].astype(jnp.float32)
    pi = fused[:, :D]
    mu = fused[:, D:2 * D]
    theta = fused[:, 2 * D:3 * D]
    scores = fused[:, 3 * D:3 * D + 1]               # pre-tanh encoded_scores

    # batch_matrix is a passthrough in the PyTorch forward (only used by the loss).
    return [pi, mu, theta, scores, batch_matrix]


def reference_forward(x, sf, params, D):
    """Pure-JAX reference of the same forward (for correctness checking)."""
    we0 = params["we0"][:D]                          # drop the zero sf row
    h = jnp.maximum(x @ we0 + params["be0"], 0.0)
    h = jnp.maximum(h @ params["we1"] + params["be1"], 0.0)
    scores = h @ params["wbt"].T + params["bb"]
    z = jnp.tanh(scores)
    d = jnp.maximum(z @ params["wd0"] + params["bd0"], 0.0)
    d = jnp.maximum(d @ params["wd1"] + params["bd1"], 0.0)
    dec = d @ params["wout"][:, :3 * D] + params["bout"][:, :3 * D]
    pi = jax.nn.sigmoid(dec[:, :D])
    mu = jnp.clip(jnp.exp(dec[:, D:2 * D]), 1e-5, 1e6) * sf.reshape(-1, 1)
    th = jnp.clip(jnp.exp(dec[:, 2 * D:]), 1e-4, 1e4)
    return pi, mu, th, scores


if __name__ == "__main__":
    input_size = 32
    hidden_sizes = (16, 8)

    key = jax.random.PRNGKey(0)
    k_x, k_p = jax.random.split(key, 2)
    params = make_params(k_p, input_size, hidden_sizes, middle_size=1)

    def run_and_check(B, block_rows, io_dtype, tol):
        kx, ksf = jax.random.split(jax.random.fold_in(k_x, B), 2)
        # Count-like non-negative inputs and positive size factors.
        x = jnp.abs(jax.random.normal(kx, (B, input_size), jnp.float32)) * 3.0
        sf = jnp.exp(0.1 * jax.random.normal(ksf, (B,), jnp.float32))
        batch_matrix = jnp.eye(2, dtype=jnp.float32)[jnp.arange(B) % 2]   # one-hot (B, 2)

        out = zinb_autoencoder_forward(x, sf, batch_matrix, params,
                                       block_rows=block_rows, io_dtype=io_dtype)
        jax.block_until_ready(out)
        pi, mu, theta, scores, bm = out
        assert pi.shape == (B, input_size)
        assert mu.shape == (B, input_size)
        assert theta.shape == (B, input_size)
        assert scores.shape == (B, 1)
        assert bm.shape == (B, 2)

        # Compare against the pure-JAX reference evaluated on the io-dtype-rounded inputs
        # (loose tol covers MXU default precision, approx reciprocal, and bf16 io rounding).
        x_q = x.astype(io_dtype).astype(jnp.float32)
        sf_q = sf.astype(io_dtype).astype(jnp.float32)
        r_pi, r_mu, r_th, r_sc = reference_forward(x_q, sf_q, params, input_size)
        for name, got, want in (("pi", pi, r_pi), ("mu", mu, r_mu),
                                ("theta", theta, r_th), ("scores", scores, r_sc)):
            assert jnp.allclose(got, want, rtol=tol, atol=tol), f"mismatch in {name} (B={B})"

    # Single-tile path, f32 io (exact-parity path with the PyTorch module).
    run_and_check(B=8, block_rows=8192, io_dtype=jnp.float32, tol=2e-2)
    # Multi-tile path: batch padding, resident weights across grid steps, bf16 io default.
    run_and_check(B=100, block_rows=16, io_dtype=jnp.bfloat16, tol=3e-2)

    print("KERNEL_OK")
</pallas_src>

<mosaic_0001>
module attributes {stable_mosaic.version = 11 : i64} {
  func.func @zinb_forward_kernel(%arg0: i32, %arg1: memref<8x33xf32, #tpu.memory_space<vmem>>, %arg2: memref<33x16xf32, #tpu.memory_space<vmem>>, %arg3: memref<1x16xf32, #tpu.memory_space<vmem>>, %arg4: memref<16x8xf32, #tpu.memory_space<vmem>>, %arg5: memref<1x8xf32, #tpu.memory_space<vmem>>, %arg6: memref<1x8xf32, #tpu.memory_space<vmem>>, %arg7: memref<1x1xf32, #tpu.memory_space<vmem>>, %arg8: memref<1x8xf32, #tpu.memory_space<vmem>>, %arg9: memref<1x8xf32, #tpu.memory_space<vmem>>, %arg10: memref<8x16xf32, #tpu.memory_space<vmem>>, %arg11: memref<1x16xf32, #tpu.memory_space<vmem>>, %arg12: memref<16x128xf32, #tpu.memory_space<vmem>>, %arg13: memref<1x128xf32, #tpu.memory_space<vmem>>, %arg14: memref<8x128xf32, #tpu.memory_space<vmem>>) attributes {dimension_semantics = [#tpu.dimension_semantics<parallel>], iteration_bounds = array<i64: 1>, scalar_prefetch = 0 : i64, scratch_operands = 0 : i64, tpu.core_type = #tpu.core_type<tc>, window_params = [{transform_indices = @transform_0, window_bounds = array<i64: 8, 33>}, {pipeline_mode = #tpu.pipeline_mode<synchronous>, transform_indices = @transform_1, window_bounds = array<i64: 33, 16>}, {pipeline_mode = #tpu.pipeline_mode<synchronous>, transform_indices = @transform_2, window_bounds = array<i64: 1, 16>}, {pipeline_mode = #tpu.pipeline_mode<synchronous>, transform_indices = @transform_3, window_bounds = array<i64: 16, 8>}, {pipeline_mode = #tpu.pipeline_mode<synchronous>, transform_indices = @transform_4, window_bounds = array<i64: 1, 8>}, {pipeline_mode = #tpu.pipeline_mode<synchronous>, transform_indices = @transform_5, window_bounds = array<i64: 1, 8>}, {pipeline_mode = #tpu.pipeline_mode<synchronous>, transform_indices = @transform_6, window_bounds = array<i64: 1, 1>}, {pipeline_mode = #tpu.pipeline_mode<synchronous>, transform_indices = @transform_7, window_bounds = array<i64: 1, 8>}, {pipeline_mode = #tpu.pipeline_mode<synchronous>, transform_indices = @transform_8, window_bounds = array<i64: 1, 8>}, {pipeline_mode = #tpu.pipeline_mode<synchronous>, transform_indices = @transform_9, window_bounds = array<i64: 8, 16>}, {pipeline_mode = #tpu.pipeline_mode<synchronous>, transform_indices = @transform_10, window_bounds = array<i64: 1, 16>}, {pipeline_mode = #tpu.pipeline_mode<synchronous>, transform_indices = @transform_11, window_bounds = array<i64: 16, 128>}, {pipeline_mode = #tpu.pipeline_mode<synchronous>, transform_indices = @transform_12, window_bounds = array<i64: 1, 128>}, {transform_indices = @transform_13, window_bounds = array<i64: 8, 128>}]} {
    %c0 = arith.constant 0 : index
    %c0_0 = arith.constant 0 : index
    %0 = vector.load %arg1[%c0, %c0_0] : memref<8x33xf32, #tpu.memory_space<vmem>>, vector<8x33xf32>
    %1 = vector.extract_strided_slice %0 {offsets = [0, 32], sizes = [8, 1], strides = [1, 1]} : vector<8x33xf32> to vector<8x1xf32>
    %c0_1 = arith.constant 0 : index
    %c0_2 = arith.constant 0 : index
    %2 = vector.load %arg2[%c0_1, %c0_2] : memref<33x16xf32, #tpu.memory_space<vmem>>, vector<33x16xf32>
    %cst = arith.constant dense<0.000000e+00> : vector<8x16xf32>
    %3 = tpu.matmul %0, %2, %cst {dimension_numbers = #tpu.dot_dimension_numbers<[1], [0], [0], [1], [0, 0, 1, 1], [], []>} : vector<8x33xf32>, vector<33x16xf32>, vector<8x16xf32> -> vector<8x16xf32>
    %c0_3 = arith.constant 0 : index
    %c0_4 = arith.constant 0 : index
    %4 = vector.load %arg3[%c0_3, %c0_4] : memref<1x16xf32, #tpu.memory_space<vmem>>, vector<1x16xf32>
    %5 = vector.broadcast %4 : vector<1x16xf32> to vector<8x16xf32>
    %6 = arith.addf %3, %5 : vector<8x16xf32>
    %cst_5 = arith.constant 0.000000e+00 : f32
    %7 = vector.broadcast %cst_5 : f32 to vector<8x16xf32>
    %8 = arith.maximumf %6, %7 : vector<8x16xf32>
    %c0_6 = arith.constant 0 : index
    %c0_7 = arith.constant 0 : index
    %9 = vector.load %arg4[%c0_6, %c0_7] : memref<16x8xf32, #tpu.memory_space<vmem>>, vector<16x8xf32>
    %cst_8 = arith.constant dense<0.000000e+00> : vector<8x8xf32>
    %10 = tpu.matmul %8, %9, %cst_8 {dimension_numbers = #tpu.dot_dimension_numbers<[1], [0], [0], [1], [0, 0, 1, 1], [], []>} : vector<8x16xf32>, vector<16x8xf32>, vector<8x8xf32> -> vector<8x8xf32>
    %c0_9 = arith.constant 0 : index
    %c0_10 = arith.constant 0 : index
    %11 = vector.load %arg5[%c0_9, %c0_10] : memref<1x8xf32, #tpu.memory_space<vmem>>, vector<1x8xf32>
    %12 = vector.broadcast %11 : vector<1x8xf32> to vector<8x8xf32>
    %13 = arith.addf %10, %12 : vector<8x8xf32>
    %cst_11 = arith.constant 0.000000e+00 : f32
    %14 = vector.broadcast %cst_11 : f32 to vector<8x8xf32>
    %15 = arith.maximumf %13, %14 : vector<8x8xf32>
    %c0_12 = arith.constant 0 : index
    %c0_13 = arith.constant 0 : index
    %16 = vector.load %arg6[%c0_12, %c0_13] : memref<1x8xf32, #tpu.memory_space<vmem>>, vector<1x8xf32>
    %17 = vector.broadcast %16 : vector<1x8xf32> to vector<8x8xf32>
    %18 = arith.mulf %15, %17 : vector<8x8xf32>
    %cst_14 = arith.constant dense<0.000000e+00> : vector<8xf32>
    %19 = vector.multi_reduction <add>, %18, %cst_14 [1] : vector<8x8xf32> to vector<8xf32>
    %20 = vector.shape_cast %19 : vector<8xf32> to vector<8x1xf32>
    %c0_15 = arith.constant 0 : index
    %c0_16 = arith.constant 0 : index
    %21 = vector.load %arg7[%c0_15, %c0_16] : memref<1x1xf32, #tpu.memory_space<vmem>>, vector<1x1xf32>
    %22 = vector.broadcast %21 : vector<1x1xf32> to vector<8x1xf32>
    %23 = arith.addf %20, %22 : vector<8x1xf32>
    %24 = math.tanh %23 : vector<8x1xf32>
    %c0_17 = arith.constant 0 : index
    %c0_18 = arith.constant 0 : index
    %25 = vector.load %arg8[%c0_17, %c0_18] : memref<1x8xf32, #tpu.memory_space<vmem>>, vector<1x8xf32>
    %26 = vector.broadcast %24 : vector<8x1xf32> to vector<8x8xf32>
    %27 = vector.broadcast %25 : vector<1x8xf32> to vector<8x8xf32>
    %28 = arith.mulf %26, %27 : vector<8x8xf32>
    %c0_19 = arith.constant 0 : index
    %c0_20 = arith.constant 0 : index
    %29 = vector.load %arg9[%c0_19, %c0_20] : memref<1x8xf32, #tpu.memory_space<vmem>>, vector<1x8xf32>
    %30 = vector.broadcast %29 : vector<1x8xf32> to vector<8x8xf32>
    %31 = arith.addf %28, %30 : vector<8x8xf32>
    %cst_21 = arith.constant 0.000000e+00 : f32
    %32 = vector.broadcast %cst_21 : f32 to vector<8x8xf32>
    %33 = arith.maximumf %31, %32 : vector<8x8xf32>
    %c0_22 = arith.constant 0 : index
    %c0_23 = arith.constant 0 : index
    %34 = vector.load %arg10[%c0_22, %c0_23] : memref<8x16xf32, #tpu.memory_space<vmem>>, vector<8x16xf32>
    %cst_24 = arith.constant dense<0.000000e+00> : vector<8x16xf32>
    %35 = tpu.matmul %33, %34, %cst_24 {dimension_numbers = #tpu.dot_dimension_numbers<[1], [0], [0], [1], [0, 0, 1, 1], [], []>} : vector<8x8xf32>, vector<8x16xf32>, vector<8x16xf32> -> vector<8x16xf32>
    %c0_25 = arith.constant 0 : index
    %c0_26 = arith.constant 0 : index
    %36 = vector.load %arg11[%c0_25, %c0_26] : memref<1x16xf32, #tpu.memory_space<vmem>>, vector<1x16xf32>
    %37 = vector.broadcast %36 : vector<1x16xf32> to vector<8x16xf32>
    %38 = arith.addf %35, %37 : vector<8x16xf32>
    %cst_27 = arith.constant 0.000000e+00 : f32
    %39 = vector.broadcast %cst_27 : f32 to vector<8x16xf32>
    %40 = arith.maximumf %38, %39 : vector<8x16xf32>
    %c0_28 = arith.constant 0 : index
    %c0_29 = arith.constant 0 : index
    %41 = vector.load %arg12[%c0_28, %c0_29] : memref<16x128xf32, #tpu.memory_space<vmem>>, vector<16x128xf32>
    %cst_30 = arith.constant dense<0.000000e+00> : vector<8x128xf32>
    %42 = tpu.matmul %40, %41, %cst_30 {dimension_numbers = #tpu.dot_dimension_numbers<[1], [0], [0], [1], [0, 0, 1, 1], [], []>} : vector<8x16xf32>, vector<16x128xf32>, vector<8x128xf32> -> vector<8x128xf32>
    %c0_31 = arith.constant 0 : index
    %c0_32 = arith.constant 0 : index
    %43 = vector.load %arg13[%c0_31, %c0_32] : memref<1x128xf32, #tpu.memory_space<vmem>>, vector<1x128xf32>
    %44 = vector.broadcast %43 : vector<1x128xf32> to vector<8x128xf32>
    %45 = arith.addf %42, %44 : vector<8x128xf32>
    %46 = tpu.iota {dimensions = array<i32: 1>} : vector<1x128xi32>
    %c32_i32 = arith.constant 32 : i32
    %47 = vector.broadcast %c32_i32 : i32 to vector<1x128xi32>
    %48 = arith.cmpi slt, %46, %47 : vector<1x128xi32>
    %c32_i32_33 = arith.constant 32 : i32
    %49 = vector.broadcast %c32_i32_33 : i32 to vector<1x128xi32>
    %50 = arith.cmpi sge, %46, %49 : vector<1x128xi32>
    %c64_i32 = arith.constant 64 : i32
    %51 = vector.broadcast %c64_i32 : i32 to vector<1x128xi32>
    %52 = arith.cmpi slt, %46, %51 : vector<1x128xi32>
    %53 = arith.andi %50, %52 : vector<1x128xi1>
    %c96_i32 = arith.constant 96 : i32
    %54 = vector.broadcast %c96_i32 : i32 to vector<1x128xi32>
    %55 = arith.cmpi eq, %46, %54 : vector<1x128xi32>
    %cst_34 = arith.constant -11.5129251 : f32
    %cst_35 = arith.constant -9.21034049 : f32
    %56 = vector.broadcast %cst_34 : f32 to vector<1x128xf32>
    %57 = vector.broadcast %cst_35 : f32 to vector<1x128xf32>
    %58 = arith.select %53, %56, %57 : vector<1x128xi1>, vector<1x128xf32>
    %cst_36 = arith.constant -3.000000e+01 : f32
    %59 = vector.broadcast %cst_36 : f32 to vector<1x128xf32>
    %60 = arith.select %48, %59, %58 : vector<1x128xi1>, vector<1x128xf32>
    %cst_37 = arith.constant 13.8155107 : f32
    %cst_38 = arith.constant 9.21034049 : f32
    %61 = vector.broadcast %cst_37 : f32 to vector<1x128xf32>
    %62 = vector.broadcast %cst_38 : f32 to vector<1x128xf32>
    %63 = arith.select %53, %61, %62 : vector<1x128xi1>, vector<1x128xf32>
    %cst_39 = arith.constant 3.000000e+01 : f32
    %64 = vector.broadcast %cst_39 : f32 to vector<1x128xf32>
    %65 = arith.select %48, %64, %63 : vector<1x128xi1>, vector<1x128xf32>
    %cst_40 = arith.constant 0.000000e+00 : f32
    %66 = vector.broadcast %cst_40 : f32 to vector<8x128xf32>
    %67 = arith.subf %66, %45 : vector<8x128xf32>
    %68 = vector.shape_cast %48 : vector<1x128xi1> to vector<1x128xi1>
    %69 = vector.broadcast %68 : vector<1x128xi1> to vector<8x128xi1>
    %70 = arith.select %69, %67, %45 : vector<8x128xi1>, vector<8x128xf32>
    %71 = vector.broadcast %60 : vector<1x128xf32> to vector<8x128xf32>
    %72 = arith.maximumf %71, %70 : vector<8x128xf32>
    %73 = vector.broadcast %65 : vector<1x128xf32> to vector<8x128xf32>
    %74 = arith.minimumf %73, %72 : vector<8x128xf32>
    %75 = math.exp %74 : vector<8x128xf32>
    %cst_41 = arith.constant 1.000000e+00 : f32
    %76 = vector.broadcast %cst_41 : f32 to vector<8x128xf32>
    %77 = arith.addf %76, %75 : vector<8x128xf32>
    %78 = tpu.reciprocal %77 {approx = true} : vector<8x128xf32> -> vector<8x128xf32>
    %79 = vector.broadcast %1 : vector<8x1xf32> to vector<8x128xf32>
    %80 = arith.mulf %75, %79 : vector<8x128xf32>
    %81 = vector.shape_cast %53 : vector<1x128xi1> to vector<1x128xi1>
    %82 = vector.broadcast %81 : vector<1x128xi1> to vector<8x128xi1>
    %83 = arith.select %82, %80, %75 : vector<8x128xi1>, vector<8x128xf32>
    %84 = vector.shape_cast %48 : vector<1x128xi1> to vector<1x128xi1>
    %85 = vector.broadcast %84 : vector<1x128xi1> to vector<8x128xi1>
    %86 = arith.select %85, %78, %83 : vector<8x128xi1>, vector<8x128xf32>
    %87 = vector.shape_cast %55 : vector<1x128xi1> to vector<1x128xi1>
    %88 = vector.broadcast %87 : vector<1x128xi1> to vector<8x128xi1>
    %89 = vector.shape_cast %23 : vector<8x1xf32> to vector<8x1xf32>
    %90 = vector.broadcast %89 : vector<8x1xf32> to vector<8x128xf32>
    %91 = arith.select %88, %90, %86 : vector<8x128xi1>, vector<8x128xf32>
    %c0_42 = arith.constant 0 : index
    %c0_43 = arith.constant 0 : index
    %92 = vector.load %arg14[%c0_42, %c0_43] : memref<8x128xf32, #tpu.memory_space<vmem>>, vector<8x128xf32>
    tpu.vector_store %arg14[%c0_42, %c0_43], %91 {strides = array<i32>} : memref<8x128xf32, #tpu.memory_space<vmem>>, vector<8x128xf32>,
    return
  }
  func.func @transform_0(%arg0: i32) -> (i32, i32) {
    %c0_i32 = arith.constant 0 : i32
    %c0_i32_0 = arith.constant 0 : i32
    return %arg0, %c0_i32 : i32, i32
  }
  func.func @transform_1(%arg0: i32) -> (i32, i32) {
    %c0_i32 = arith.constant 0 : i32
    %c0_i32_0 = arith.constant 0 : i32
    %c0_i32_1 = arith.constant 0 : i32
    return %c0_i32, %c0_i32_0 : i32, i32
  }
  func.func @transform_2(%arg0: i32) -> (i32, i32) {
    %c0_i32 = arith.constant 0 : i32
    %c0_i32_0 = arith.constant 0 : i32
    %c0_i32_1 = arith.constant 0 : i32
    return %c0_i32, %c0_i32_0 : i32, i32
  }
  func.func @transform_3(%arg0: i32) -> (i32, i32) {
    %c0_i32 = arith.constant 0 : i32
    %c0_i32_0 = arith.constant 0 : i32
    %c0_i32_1 = arith.constant 0 : i32
    return %c0_i32, %c0_i32_0 : i32, i32
  }
  func.func @transform_4(%arg0: i32) -> (i32, i32) {
    %c0_i32 = arith.constant 0 : i32
    %c0_i32_0 = arith.constant 0 : i32
    %c0_i32_1 = arith.constant 0 : i32
    return %c0_i32, %c0_i32_0 : i32, i32
  }
  func.func @transform_5(%arg0: i32) -> (i32, i32) {
    %c0_i32 = arith.constant 0 : i32
    %c0_i32_0 = arith.constant 0 : i32
    %c0_i32_1 = arith.constant 0 : i32
    return %c0_i32, %c0_i32_0 : i32, i32
  }
  func.func @transform_6(%arg0: i32) -> (i32, i32) {
    %c0_i32 = arith.constant 0 : i32
    %c0_i32_0 = arith.constant 0 : i32
    %c0_i32_1 = arith.constant 0 : i32
    return %c0_i32, %c0_i32_0 : i32, i32
  }
  func.func @transform_7(%arg0: i32) -> (i32, i32) {
    %c0_i32 = arith.constant 0 : i32
    %c0_i32_0 = arith.constant 0 : i32
    %c0_i32_1 = arith.constant 0 : i32
    return %c0_i32, %c0_i32_0 : i32, i32
  }
  func.func @transform_8(%arg0: i32) -> (i32, i32) {
    %c0_i32 = arith.constant 0 : i32
    %c0_i32_0 = arith.constant 0 : i32
    %c0_i32_1 = arith.constant 0 : i32
    return %c0_i32, %c0_i32_0 : i32, i32
  }
  func.func @transform_9(%arg0: i32) -> (i32, i32) {
    %c0_i32 = arith.constant 0 : i32
    %c0_i32_0 = arith.constant 0 : i32
    %c0_i32_1 = arith.constant 0 : i32
    return %c0_i32, %c0_i32_0 : i32, i32
  }
  func.func @transform_10(%arg0: i32) -> (i32, i32) {
    %c0_i32 = arith.constant 0 : i32
    %c0_i32_0 = arith.constant 0 : i32
    %c0_i32_1 = arith.constant 0 : i32
    return %c0_i32, %c0_i32_0 : i32, i32
  }
  func.func @transform_11(%arg0: i32) -> (i32, i32) {
    %c0_i32 = arith.constant 0 : i32
    %c0_i32_0 = arith.constant 0 : i32
    %c0_i32_1 = arith.constant 0 : i32
    return %c0_i32, %c0_i32_0 : i32, i32
  }
  func.func @transform_12(%arg0: i32) -> (i32, i32) {
    %c0_i32 = arith.constant 0 : i32
    %c0_i32_0 = arith.constant 0 : i32
    %c0_i32_1 = arith.constant 0 : i32
    return %c0_i32, %c0_i32_0 : i32, i32
  }
  func.func @transform_13(%arg0: i32) -> (i32, i32) {
    %c0_i32 = arith.constant 0 : i32
    %c0_i32_0 = arith.constant 0 : i32
    return %arg0, %c0_i32 : i32, i32
  }
}

</mosaic_0001>

<llo_original>
// kernel: tpu_custom_call.1
$region0: #{tpu_custom_call.1}
  #allocation0 [shape = 'u32[]', space=smem, size = 0x4, offset = 0x4, fixed_abs, tag = 'smem constant byte address 0x4 - core index']
  #allocation1 [shape = 'u32[72,128]{1,0:T(1,128)}', space=vmem, size = 0x9000, scoped, tag = 'internal scratch']
  #allocation2 [shape = 'f32[1,1]{1,0:T(1,128)S(1)}', space=vmem, size = 0x200, scoped, tag = 'scoped memory for tpu_custom_call.1']
  %s0 = inlined_call_operand.vmem [shape: f32[8,33], index: 0, kind: input, shape index: {}]
  %s1 = inlined_call_operand.vmem [shape: f32[33,16], index: 1, kind: input, shape index: {}]
  %s2 = inlined_call_operand.vmem [shape: f32[1,16], index: 2, kind: input, shape index: {}]
  %s3 = inlined_call_operand.vmem [shape: f32[16,8], index: 3, kind: input, shape index: {}]
  %s4 = inlined_call_operand.vmem [shape: f32[1,8], index: 4, kind: input, shape index: {}]
  %s5 = inlined_call_operand.vmem [shape: f32[1,8], index: 5, kind: input, shape index: {}]
  %s6 = inlined_call_operand.<no memory space> [shape: f32[1,1], index: 6, kind: input, shape index: {}]
  %s7 = inlined_call_operand.vmem [shape: f32[1,8], index: 7, kind: input, shape index: {}]
  %s8 = inlined_call_operand.vmem [shape: f32[1,8], index: 8, kind: input, shape index: {}]
  %s9 = inlined_call_operand.vmem [shape: f32[8,16], index: 9, kind: input, shape index: {}]
  %s10 = inlined_call_operand.vmem [shape: f32[1,16], index: 10, kind: input, shape index: {}]
  %s11 = inlined_call_operand.vmem [shape: f32[16,128], index: 11, kind: input, shape index: {}]
  %s12 = inlined_call_operand.vmem [shape: f32[1,128], index: 12, kind: input, shape index: {}]
  %s13 = inlined_call_operand.hbm [shape: f32[8,128], index: 13, kind: output, shape index: {}]
  %s14 = sld [smem:[#allocation0]]
  $region62: #{tpu_custom_call.1} parent=0
    _
  %s16 = ssub.s32 1, %s14
  %s17 = scalar_select 0, %s16, %s14
  %v18 = vstv %s6
  %19 = vst [vmem:[#allocation2] sm:$0x1] %v18
  $region1: #{tpu_custom_call.1} parent=0
    #allocation3 [shape = 'u8[4096]{0}', space=vmem, size = 0x1000, scoped, tag = 'output window, operand 0, single buffered']
    #allocation4 [shape = 's32[1]{0}', space=sflag, size = 0x4, scoped, tag = 'scoped memory for tpu_custom_call.1']
    %20 = vsyncpa [#allocation4], 0
    // Predicated region
    $region2: #{tpu_custom_call.1} parent=1 // pred_check
      _
    $region3: #{tpu_custom_call.1} parent=1 // pred_check_branch
      %22 = sbr.rel (0) target = $region5
    $region4: #{tpu_custom_call.1} parent=1 // pred_region
      _
    $region5: #{tpu_custom_call.1} parent=1 // pred_fallthru
      _
    // Predicated region
    $region6: #{tpu_custom_call.1} parent=1 // pred_check
      _
    $region7: #{tpu_custom_call.1} parent=1 // pred_check_branch
      %24 = sbr.rel (0) target = $region9
    $region8: #{tpu_custom_call.1} parent=1 // pred_region
      _
    $region9: #{tpu_custom_call.1} parent=1 // pred_fallthru
      _
    // Predicated region
    $region10: #{tpu_custom_call.1} parent=1 // pred_check
      _
    $region11: #{tpu_custom_call.1} parent=1 // pred_check_branch
      %26 = sbr.rel (0) target = $region13
    $region12: #{tpu_custom_call.1} parent=1 // pred_region
      _
    $region13: #{tpu_custom_call.1} parent=1 // pred_fallthru
      _
    // Predicated region
    $region14: #{tpu_custom_call.1} parent=1 // pred_check
      _
    $region15: #{tpu_custom_call.1} parent=1 // pred_check_branch
      %28 = sbr.rel (0) target = $region17
    $region16: #{tpu_custom_call.1} parent=1 // pred_region
      _
    $region17: #{tpu_custom_call.1} parent=1 // pred_fallthru
      _
    // Predicated region
    $region18: #{tpu_custom_call.1} parent=1 // pred_check
      _
    $region19: #{tpu_custom_call.1} parent=1 // pred_check_branch
      %30 = sbr.rel (0) target = $region21
    $region20: #{tpu_custom_call.1} parent=1 // pred_region
      _
    $region21: #{tpu_custom_call.1} parent=1 // pred_fallthru
      _
    // Predicated region
    $region22: #{tpu_custom_call.1} parent=1 // pred_check
      _
    $region23: #{tpu_custom_call.1} parent=1 // pred_check_branch
      %32 = sbr.rel (0) target = $region25
    $region24: #{tpu_custom_call.1} parent=1 // pred_region
      _
    $region25: #{tpu_custom_call.1} parent=1 // pred_fallthru
      _
    // Predicated region
    $region26: #{tpu_custom_call.1} parent=1 // pred_check
      _
    $region27: #{tpu_custom_call.1} parent=1 // pred_check_branch
      %34 = sbr.rel (0) target = $region29
    $region28: #{tpu_custom_call.1} parent=1 // pred_region
      _
    $region29: #{tpu_custom_call.1} parent=1 // pred_fallthru
      _
    // Predicated region
    $region30: #{tpu_custom_call.1} parent=1 // pred_check
      _
    $region31: #{tpu_custom_call.1} parent=1 // pred_check_branch
      %36 = sbr.rel (0) target = $region33
    $region32: #{tpu_custom_call.1} parent=1 // pred_region
      _
    $region33: #{tpu_custom_call.1} parent=1 // pred_fallthru
      _
    // Predicated region
    $region34: #{tpu_custom_call.1} parent=1 // pred_check
      _
    $region35: #{tpu_custom_call.1} parent=1 // pred_check_branch
      %38 = sbr.rel (0) target = $region37
    $region36: #{tpu_custom_call.1} parent=1 // pred_region
      _
    $region37: #{tpu_custom_call.1} parent=1 // pred_fallthru
      _
    // Predicated region
    $region38: #{tpu_custom_call.1} parent=1 // pred_check
      _
    $region39: #{tpu_custom_call.1} parent=1 // pred_check_branch
      %40 = sbr.rel (0) target = $region41
    $region40: #{tpu_custom_call.1} parent=1 // pred_region
      _
    $region41: #{tpu_custom_call.1} parent=1 // pred_fallthru
      _
    // Predicated region
    $region42: #{tpu_custom_call.1} parent=1 // pred_check
      _
    $region43: #{tpu_custom_call.1} parent=1 // pred_check_branch
      %42 = sbr.rel (0) target = $region45
    $region44: #{tpu_custom_call.1} parent=1 // pred_region
      _
    $region45: #{tpu_custom_call.1} parent=1 // pred_fallthru
      _
    // Predicated region
    $region46: #{tpu_custom_call.1} parent=1 // pred_check
      _
    $region47: #{tpu_custom_call.1} parent=1 // pred_check_branch
      %44 = sbr.rel (0) target = $region49
    $region48: #{tpu_custom_call.1} parent=1 // pred_region
      _
    $region49: #{tpu_custom_call.1} parent=1 // pred_fallthru
      _
    // Predicated region
    $region50: #{tpu_custom_call.1} parent=1 // pred_check
      _
    $region51: #{tpu_custom_call.1} parent=1 // pred_check_branch
      %46 = sbr.rel (0) target = $region53
    $region52: #{tpu_custom_call.1} parent=1 // pred_region
      _
    $region53: #{tpu_custom_call.1} parent=1 // pred_fallthru
      _
    %v47 = vld [vmem:[%s0] sm:$0xff]
    %v48 = vld [vmem:[%s1] sm:$0xff]
    %v49 = vld [vmem:[%s1 + $0x8] sm:$0xff]
    %v50 = vld [vmem:[%s1 + $0x10] sm:$0xff]
    %v51 = vld [vmem:[%s1 + $0x18] sm:$0xff]
    %v52 = vld [vmem:[%s1 + $0x20] sm:$0x1]
    %v53 = vld [vmem:[%s2] sm:$0x1]
    %v55 = vperm.slane %v53, 0
    %vm57 = vcmask 269312
    %v59 = vsel %vm57, %v47, 0
    %vm61 = vcmask 1040384
    %v63 = vsel %vm61, %v52, 0
    %65 = vmatpush.msra.mxu0 0.0
    %66 = vmatpush.msra.mxu0 0.0
    %67 = vmatpush.msra.mxu0 0.0
    %68 = vmatpush.msra.mxu0 0.0
    %69 = vmatpush.msra.mxu0 0.0
    %70 = vmatpush.msra.mxu0 0.0
    %71 = vmatpush.msra.mxu0 0.0
    %72 = vmatpush.msra.mxu0 0.0
    %73 = vmatpush.msra.mxu0 0.0
    %74 = vmatpush.msra.mxu0 0.0
    %75 = vmatpush.msra.mxu0 0.0
    %76 = vmatpush.msra.mxu0 %v63
    %77 = vmatpush.msra.mxu0 %v51
    %78 = vmatpush.msra.mxu0 %v50
    %79 = vmatpush.msra.mxu0 %v49
    %80 = vmatpush.msra.mxu0 %v48
    %81 = vmatmul.f32.gmra.mxu0 %v59
    %v82 = vpop.f32.mrf.mxu0
    %v83 = vadd.f32 %v55, %v82
    %84 = vdwg.mxu0
    %v85 = vmax.f32 %v83, 0.0
    %v86 = vld [vmem:[%s3] sm:$0xff]
    %v87 = vld [vmem:[%s3 + $0x8] sm:$0xff]
    %v88 = vld [vmem:[%s4] sm:$0x1]
    %v90 = vperm.slane %v88, 0
    %vm92 = vcmask 130048
    %v94 = vsel %vm92, %v85, 0
    %96 = vmatpush.msra.mxu0 0.0
    %97 = vmatpush.msra.mxu0 0.0
    %98 = vmatpush.msra.mxu0 0.0
    %99 = vmatpush.msra.mxu0 0.0
    %100 = vmatpush.msra.mxu0 0.0
    %101 = vmatpush.msra.mxu0 0.0
    %102 = vmatpush.msra.mxu0 0.0
    %103 = vmatpush.msra.mxu0 0.0
    %104 = vmatpush.msra.mxu0 0.0
    %105 = vmatpush.msra.mxu0 0.0
    %106 = vmatpush.msra.mxu0 0.0
    %107 = vmatpush.msra.mxu0 0.0
    %108 = vmatpush.msra.mxu0 0.0
    %109 = vmatpush.msra.mxu0 0.0
    %110 = vmatpush.msra.mxu0 %v87
    %111 = vmatpush.msra.mxu0 %v86
    %112 = vmatmul.f32.gmra.mxu0 %v94
    %v113 = vpop.f32.mrf.mxu0
    %v114 = vadd.f32 %v90, %v113
    %115 = vdwg.mxu0
    %v116 = vmax.f32 %v114, 0.0
    %v117 = vld [vmem:[%s5] sm:$0x1]
    %v119 = vperm.slane %v117, 0
    %v121 = vmul.f32 %v116, %v119
    %vm122 = vcmask 64512
    %v123 = vsel %vm122, %v121, 0.0
    %124 = vadd.xlane.f32.xlu0 %v123
    %v125 = vpop.xlane.xlu0 %124
    %v126 = vld [vmem:[#allocation2] sm:$0x1]
    %v128 = vperm.slane %v126, 0
    %v130 = vadd.f32 %v125, %v128
    %v131 = vtanh.pop %v130
    %v132 = vld [vmem:[%s7] sm:$0x1]
    %134 = vset.pattern.permute.xlu0 0
    %135 = vperm.xlu0 %134, %v131
    %v136 = vpop.permute.xlu0 %135
    %v139 = vperm.slane %v132, 0
    %v141 = vmul.f32 %v136, %v139
    %v142 = vld [vmem:[%s8] sm:$0x1]
    %v144 = vperm.slane %v142, 0
    %v146 = vadd.f32 %v141, %v144
    %v147 = vmax.f32 %v146, 0.0
    %v148 = vld [vmem:[%s9] sm:$0xff]
    %v149 = vld [vmem:[%s10] sm:$0x1]
    %v151 = vperm.slane %v149, 0
    %v154 = vsel %vm122, %v147, 0
    %156 = vmatpush.msra.mxu0 0.0
    %157 = vmatpush.msra.mxu0 0.0
    %158 = vmatpush.msra.mxu0 0.0
    %159 = vmatpush.msra.mxu0 0.0
    %160 = vmatpush.msra.mxu0 0.0
    %161 = vmatpush.msra.mxu0 0.0
    %162 = vmatpush.msra.mxu0 0.0
    %163 = vmatpush.msra.mxu0 0.0
    %164 = vmatpush.msra.mxu0 0.0
    %165 = vmatpush.msra.mxu0 0.0
    %166 = vmatpush.msra.mxu0 0.0
    %167 = vmatpush.msra.mxu0 0.0
    %168 = vmatpush.msra.mxu0 0.0
    %169 = vmatpush.msra.mxu0 0.0
    %170 = vmatpush.msra.mxu0 0.0
    %171 = vmatpush.msra.mxu0 %v148
    %172 = vmatmul.f32.gmra.mxu0 %v154
    %v173 = vpop.f32.mrf.mxu0
    %v174 = vadd.f32 %v151, %v173
    %175 = vdwg.mxu0
    %v176 = vmax.f32 %v174, 0.0
    %v177 = vld [vmem:[%s11] sm:$0xff]
    %v178 = vld [vmem:[%s11 + $0x8] sm:$0xff]
    %v179 = vld [vmem:[%s12] sm:$0x1]
    %v181 = vperm.slane %v179, 0
    %v184 = vsel %vm92, %v176, 0
    %186 = vmatpush.msra.mxu0 0.0
    %187 = vmatpush.msra.mxu0 0.0
    %188 = vmatpush.msra.mxu0 0.0
    %189 = vmatpush.msra.mxu0 0.0
    %190 = vmatpush.msra.mxu0 0.0
    %191 = vmatpush.msra.mxu0 0.0
    %192 = vmatpush.msra.mxu0 0.0
    %193 = vmatpush.msra.mxu0 0.0
    %194 = vmatpush.msra.mxu0 0.0
    %195 = vmatpush.msra.mxu0 0.0
    %196 = vmatpush.msra.mxu0 0.0
    %197 = vmatpush.msra.mxu0 0.0
    %198 = vmatpush.msra.mxu0 0.0
    %199 = vmatpush.msra.mxu0 0.0
    %200 = vmatpush.msra.mxu0 %v178
    %201 = vmatpush.msra.mxu0 %v177
    %202 = vmatmul.f32.gmra.mxu0 %v184
    %v203 = vpop.f32.mrf.mxu0
    %v204 = vadd.f32 %v181, %v203
    %205 = vdwg.mxu0
    %v206 = vlaneseq
    %v207 = vand.u32 %v206, 127
    %vm208 = vcmp.lt.s32.totalorder %v207, 32
    %vm209 = vcmp.ge.s32.totalorder %v207, 32
    %vm210 = vcmp.lt.s32.totalorder %v207, 64
    %vm211 = vmand %vm209, %vm210
    %vm212 = vcmp.eq.s32.totalorder %v207, 96
    %v213 = vsel %vm211, -11.512925, -9.2103405
    %v214 = vsel %vm208, -30.0, %v213
    %v215 = vsel %vm211, 13.815511, 9.2103405
    %v216 = vsel %vm208, 30.0, %v215
    %v217 = vsub.f32 0.0, %v204
    %v218 = vsel %vm208, 1, 0
    %vm219 = vcmp.eq.s32.totalorder %v218, 1
    %v220 = vsel %vm219, %v217, %v204
    %v221 = vmax.f32 %v214, %v220
    %v222 = vmin.f32 %v216, %v221
    %v223 = vmul.f32 %v222, 1.442695
    %v224 = vpow.pop %v223
    %v225 = vadd.f32 %v224, 1.0
    %v226 = vrcp.pop %v225
    %227 = vset.pattern.permute.xlu0 32
    %228 = vperm.xlu0 %227, %v47
    %v229 = vpop.permute.xlu0 %228
    %v231 = vmul.f32 %v224, %v229
    %v232 = vsel %vm211, 1, 0
    %vm233 = vcmp.eq.s32.totalorder %v232, 1
    %v234 = vsel %vm233, %v231, %v224
    %v235 = vsel %vm219, %v226, %v234
    %v236 = vsel %vm212, 1, 0
    %vm237 = vcmp.eq.s32.totalorder %v236, 1
    %239 = vset.pattern.permute.xlu0 0
    %240 = vperm.xlu0 %239, %v130
    %v241 = vpop.permute.xlu0 %240
    %v243 = vsel %vm237, %v241, %v235
    %244 = vst [vmem:[#allocation3] sm:$0xff] %v243
    // Predicated region
    $region54: #{tpu_custom_call.1} parent=1 // pred_check
      _
    $region55: #{tpu_custom_call.1} parent=1 // pred_check_branch
      %246 = sbr.rel (0) target = $region57
    $region56: #{tpu_custom_call.1} parent=1 // pred_region
      %248 = vsyncadd [#allocation4], 0
      %s250 = sshll.u32 [#allocation3], 4
      %s251 = int_to_ptr.vmem [resolvable:$true] %s250
      %s252 = sshll.u32 %s13, 4
      %s253 = int_to_ptr.hbm [resolvable:$true] %s252
      %255 = dma.vmem_to_hbm [thread:$0]  %s251, 128, %s253, [#allocation4]
    $region57: #{tpu_custom_call.1} parent=1 // pred_fallthru
      _
    // Predicated region
    $region58: #{tpu_custom_call.1} parent=1 // pred_check
      _
    $region59: #{tpu_custom_call.1} parent=1 // pred_check_branch
      %257 = sbr.rel (0) target = $region61
    $region60: #{tpu_custom_call.1} parent=1 // pred_region
      %259 = dma.done [#allocation4], 128
    $region61: #{tpu_custom_call.1} parent=1 // pred_fallthru
      _
    %260 = vsyncpa [#allocation4], 1

</llo_original>
